<compile_context>
chip_gen: v7x
topology: tpu7x:2x2x1
jax: 0.10.0
libtpu: 0.0.40
codegen_flags: <defaults>
</compile_context>

<pallas_src>
import jax
import jax.numpy as jnp
import numpy as np
from jax import lax
from jax.experimental import pallas as pl
from jax.experimental.pallas import tpu as pltpu


def make_rope_tables(embed_dim: int, max_seq_len: int, rope_theta: float,
                     dtype=jnp.float32):
    """Mirrors RotaryEncoding.__init__ buffers + kernel-ready interleaved forms."""
    half = jnp.arange(0, embed_dim, 2, dtype=jnp.float32)
    theta = rope_theta ** (-half / embed_dim)
    position = jnp.arange(max_seq_len, dtype=jnp.float32)[:, None]
    angles = position * theta[None, :]                         # (L_max, D/2)
    cos = jnp.cos(angles).astype(dtype)
    sin = jnp.sin(angles).astype(dtype)
    # Interleaved forms used by the kernel (hoisted out of the per-call path).
    cos_int = jnp.repeat(cos, 2, axis=-1)                      # (L_max, D)
    sin_sgn = jnp.stack([sin, -sin], axis=-1).reshape(max_seq_len, embed_dim)
    return cos, sin, cos_int, sin_sgn


def _rope_kernel(cos_ref, sin_ref, q_ref, k_ref, qo_ref, ko_ref):
    """One (TB, TL) tile of q and k: out = x*cos + select(parity, roll(x*sin))."""
    cos = cos_ref[...]                           # (1, TL), broadcast over rows
    sin = sin_ref[...]                           # (1, TL), sign-interleaved
    tl = q_ref.shape[-1]
    lane = lax.broadcasted_iota(jnp.int32, q_ref.shape, 1)
    even = (lane % 2) == 0

    for x_ref, o_ref in ((q_ref, qo_ref), (k_ref, ko_ref)):
        x = x_ref[...]                           # (TB, TL)
        y = x * sin
        y_next = pltpu.roll(y, tl - 1, 1)        # y_next[j] = y[j+1]
        y_prev = pltpu.roll(y, 1, 1)             # y_prev[j] = y[j-1]
        o_ref[...] = x * cos + jnp.where(even, y_next, y_prev)


# ~1 MiB per q/k block => 4 big operands x 2 buffers ~= 8 MiB, which fits the
# smallest default scoped-VMEM budget (v5e 16 MiB, v7x 32 MiB) with headroom.
_BLOCK_BYTE_CAP = 1 << 20


def _largest_tile(total, unit, cap):
    """Largest multiple of `unit` that divides `total` and is <= cap (or None)."""
    best = None
    t = unit
    while t <= min(total, cap):
        if total % t == 0:
            best = t
        t += unit
    return best


def _choose_tiles(rows, lanes, itemsize):
    if lanes % 128 == 0:
        tl = _largest_tile(lanes, 128, 2048) or lanes
    else:
        tl = lanes                                # full-dim block is always legal
    row_cap = max(1, _BLOCK_BYTE_CAP // (tl * itemsize))
    if rows % 8 == 0:
        tb = _largest_tile(rows, 8, row_cap) or rows
    else:
        tb = rows                                 # full-dim block is always legal
    return tb, tl


@jax.jit
def rotary_encoding(q, k, cos_int, sin_sgn):
    """Pallas forward: returns (rotate(q), rotate(k))."""
    B, S, D = q.shape
    assert k.shape == q.shape and k.dtype == q.dtype
    assert D % 2 == 0
    max_seq, d_tbl = cos_int.shape
    assert d_tbl == D and S <= max_seq, "sequence longer than RoPE table"

    L = S * D
    dtype = q.dtype
    itemsize = jnp.dtype(dtype).itemsize

    # Lane-dense 2-D views; tables cast to the compute dtype (halves table DMA
    # when q/k are bf16).
    cos2d = cos_int[:S].reshape(1, L).astype(dtype)
    sin2d = sin_sgn[:S].reshape(1, L).astype(dtype)
    q2d = q.reshape(B, L)
    k2d = k.reshape(B, L)

    tb, tl = _choose_tiles(B, L, itemsize)
    grid = (B // tb, L // tl)

    tbl_spec = pl.BlockSpec((1, tl), lambda i, j: (0, j))
    x_spec = pl.BlockSpec((tb, tl), lambda i, j: (i, j))

    q_rot, k_rot = pl.pallas_call(
        _rope_kernel,
        out_shape=(jax.ShapeDtypeStruct((B, L), dtype),
                   jax.ShapeDtypeStruct((B, L), dtype)),
        grid_spec=pltpu.PrefetchScalarGridSpec(
            num_scalar_prefetch=0,
            grid=grid,
            in_specs=[tbl_spec, tbl_spec, x_spec, x_spec],
            out_specs=[x_spec, x_spec],
        ),
        input_output_aliases={2: 0, 3: 1},   # rotate q/k in place
        compiler_params=pltpu.CompilerParams(
            dimension_semantics=("parallel", "parallel")),
    )(cos2d, sin2d, q2d, k2d)
    return q_rot.reshape(B, S, D), k_rot.reshape(B, S, D)


def _rotate_ref(x, cos, sin):
    """Pure-JAX reference matching RotaryEncoding._rotate exactly."""
    S = x.shape[1]
    x_even, x_odd = x[..., 0::2], x[..., 1::2]
    c, s = cos[:S], sin[:S]
    re = x_even * c - x_odd * s
    ro = x_odd * c + x_even * s
    return jnp.stack([re, ro], axis=-1).reshape(x.shape)


if __name__ == "__main__":
    # Small config consistent with the module: embed_dim=32, max_seq_len=16.
    B, S, D = 2, 8, 32
    MAX_SEQ_LEN = 16
    ROPE_THETA = 10000.0

    key = jax.random.PRNGKey(0)
    kq, kk = jax.random.split(key)
    q = jax.random.normal(kq, (B, S, D), dtype=jnp.float32)
    k = jax.random.normal(kk, (B, S, D), dtype=jnp.float32)

    cos, sin, cos_int, sin_sgn = make_rope_tables(D, MAX_SEQ_LEN, ROPE_THETA)

    q_rot, k_rot = rotary_encoding(q, k, cos_int, sin_sgn)
    jax.block_until_ready((q_rot, k_rot))

    q_exp = _rotate_ref(q, cos, sin)
    k_exp = _rotate_ref(k, cos, sin)
    np.testing.assert_allclose(np.asarray(q_rot), np.asarray(q_exp),
                               rtol=1e-5, atol=1e-5)
    np.testing.assert_allclose(np.asarray(k_rot), np.asarray(k_exp),
                               rtol=1e-5, atol=1e-5)

    print("KERNEL_OK")
</pallas_src>

<mosaic_0001>
module attributes {stable_mosaic.version = 11 : i64} {
  func.func @_rope_kernel(%arg0: i32, %arg1: i32, %arg2: memref<1x256xf32, #tpu.memory_space<vmem>>, %arg3: memref<1x256xf32, #tpu.memory_space<vmem>>, %arg4: memref<2x256xf32, #tpu.memory_space<vmem>>, %arg5: memref<2x256xf32, #tpu.memory_space<vmem>>, %arg6: memref<2x256xf32, #tpu.memory_space<vmem>>, %arg7: memref<2x256xf32, #tpu.memory_space<vmem>>) attributes {dimension_semantics = [#tpu.dimension_semantics<parallel>, #tpu.dimension_semantics<parallel>], iteration_bounds = array<i64: 1, 1>, scalar_prefetch = 0 : i64, scratch_operands = 0 : i64, tpu.core_type = #tpu.core_type<tc>, window_params = [{transform_indices = @transform_0, window_bounds = array<i64: 1, 256>}, {transform_indices = @transform_1, window_bounds = array<i64: 1, 256>}, {transform_indices = @transform_2, window_bounds = array<i64: 2, 256>}, {transform_indices = @transform_3, window_bounds = array<i64: 2, 256>}, {transform_indices = @transform_4, window_bounds = array<i64: 2, 256>}, {transform_indices = @transform_5, window_bounds = array<i64: 2, 256>}]} {
    %c0 = arith.constant 0 : index
    %c0_0 = arith.constant 0 : index
    %0 = vector.load %arg2[%c0, %c0_0] : memref<1x256xf32, #tpu.memory_space<vmem>>, vector<1x256xf32>
    %c0_1 = arith.constant 0 : index
    %c0_2 = arith.constant 0 : index
    %1 = vector.load %arg3[%c0_1, %c0_2] : memref<1x256xf32, #tpu.memory_space<vmem>>, vector<1x256xf32>
    %2 = tpu.iota {dimensions = array<i32: 1>} : vector<2x256xi32>
    %c2_i32 = arith.constant 2 : i32
    %c0_i32 = arith.constant 0 : i32
    %3 = arith.cmpi eq, %c2_i32, %c0_i32 : i32
    %c1_i32 = arith.constant 1 : i32
    %4 = arith.select %3, %c1_i32, %c2_i32 : i32
    %5 = vector.broadcast %4 : i32 to vector<2x256xi32>
    %6 = arith.remsi %2, %5 : vector<2x256xi32>
    %c0_i32_3 = arith.constant 0 : i32
    %7 = vector.broadcast %c0_i32_3 : i32 to vector<2x256xi32>
    %8 = arith.cmpi ne, %6, %7 : vector<2x256xi32>
    %c0_i32_4 = arith.constant 0 : i32
    %9 = vector.broadcast %c0_i32_4 : i32 to vector<2x256xi32>
    %10 = arith.cmpi slt, %6, %9 : vector<2x256xi32>
    %c0_i32_5 = arith.constant 0 : i32
    %11 = arith.cmpi slt, %4, %c0_i32_5 : i32
    %12 = vector.broadcast %11 : i1 to vector<2x256xi1>
    %13 = vector.broadcast %12 : vector<2x256xi1> to vector<2x256xi1>
    %14 = arith.xori %10, %13 : vector<2x256xi1>
    %15 = arith.andi %14, %8 : vector<2x256xi1>
    %16 = vector.broadcast %4 : i32 to vector<2x256xi32>
    %17 = arith.addi %6, %16 : vector<2x256xi32>
    %18 = arith.select %15, %17, %6 : vector<2x256xi1>, vector<2x256xi32>
    %c0_i32_6 = arith.constant 0 : i32
    %19 = vector.broadcast %c0_i32_6 : i32 to vector<2x256xi32>
    %20 = arith.cmpi eq, %18, %19 : vector<2x256xi32>
    %c0_7 = arith.constant 0 : index
    %c0_8 = arith.constant 0 : index
    %21 = vector.load %arg4[%c0_7, %c0_8] : memref<2x256xf32, #tpu.memory_space<vmem>>, vector<2x256xf32>
    %22 = vector.broadcast %1 : vector<1x256xf32> to vector<2x256xf32>
    %23 = arith.mulf %21, %22 : vector<2x256xf32>
    %c255_i32 = arith.constant 255 : i32
    %24 = tpu.dynamic_rotate %23 by %c255_i32 dim 1 : vector<2x256xf32>, i32 -> vector<2x256xf32>
    %c1_i32_9 = arith.constant 1 : i32
    %25 = tpu.dynamic_rotate %23 by %c1_i32_9 dim 1 : vector<2x256xf32>, i32 -> vector<2x256xf32>
    %26 = vector.broadcast %0 : vector<1x256xf32> to vector<2x256xf32>
    %27 = arith.mulf %21, %26 : vector<2x256xf32>
    %28 = arith.select %20, %24, %25 : vector<2x256xi1>, vector<2x256xf32>
    %29 = arith.addf %27, %28 : vector<2x256xf32>
    %c0_10 = arith.constant 0 : index
    %c0_11 = arith.constant 0 : index
    %30 = vector.load %arg6[%c0_10, %c0_11] : memref<2x256xf32, #tpu.memory_space<vmem>>, vector<2x256xf32>
    tpu.vector_store %arg6[%c0_10, %c0_11], %29 {strides = array<i32>} : memref<2x256xf32, #tpu.memory_space<vmem>>, vector<2x256xf32>,
    %c0_12 = arith.constant 0 : index
    %c0_13 = arith.constant 0 : index
    %31 = vector.load %arg5[%c0_12, %c0_13] : memref<2x256xf32, #tpu.memory_space<vmem>>, vector<2x256xf32>
    %32 = vector.broadcast %1 : vector<1x256xf32> to vector<2x256xf32>
    %33 = arith.mulf %31, %32 : vector<2x256xf32>
    %c255_i32_14 = arith.constant 255 : i32
    %34 = tpu.dynamic_rotate %33 by %c255_i32_14 dim 1 : vector<2x256xf32>, i32 -> vector<2x256xf32>
    %c1_i32_15 = arith.constant 1 : i32
    %35 = tpu.dynamic_rotate %33 by %c1_i32_15 dim 1 : vector<2x256xf32>, i32 -> vector<2x256xf32>
    %36 = vector.broadcast %0 : vector<1x256xf32> to vector<2x256xf32>
    %37 = arith.mulf %31, %36 : vector<2x256xf32>
    %38 = arith.select %20, %34, %35 : vector<2x256xi1>, vector<2x256xf32>
    %39 = arith.addf %37, %38 : vector<2x256xf32>
    %c0_16 = arith.constant 0 : index
    %c0_17 = arith.constant 0 : index
    %40 = vector.load %arg7[%c0_16, %c0_17] : memref<2x256xf32, #tpu.memory_space<vmem>>, vector<2x256xf32>
    tpu.vector_store %arg7[%c0_16, %c0_17], %39 {strides = array<i32>} : memref<2x256xf32, #tpu.memory_space<vmem>>, vector<2x256xf32>,
    return
  }
  func.func @transform_0(%arg0: i32, %arg1: i32) -> (i32, i32) {
    %c0_i32 = arith.constant 0 : i32
    %c0_i32_0 = arith.constant 0 : i32
    return %c0_i32, %arg1 : i32, i32
  }
  func.func @transform_1(%arg0: i32, %arg1: i32) -> (i32, i32) {
    %c0_i32 = arith.constant 0 : i32
    %c0_i32_0 = arith.constant 0 : i32
    return %c0_i32, %arg1 : i32, i32
  }
  func.func @transform_2(%arg0: i32, %arg1: i32) -> (i32, i32) {
    %c0_i32 = arith.constant 0 : i32
    return %arg0, %arg1 : i32, i32
  }
  func.func @transform_3(%arg0: i32, %arg1: i32) -> (i32, i32) {
    %c0_i32 = arith.constant 0 : i32
    return %arg0, %arg1 : i32, i32
  }
  func.func @transform_4(%arg0: i32, %arg1: i32) -> (i32, i32) {
    %c0_i32 = arith.constant 0 : i32
    return %arg0, %arg1 : i32, i32
  }
  func.func @transform_5(%arg0: i32, %arg1: i32) -> (i32, i32) {
    %c0_i32 = arith.constant 0 : i32
    return %arg0, %arg1 : i32, i32
  }
}

</mosaic_0001>

<llo_original>
// kernel: rotary_encoding.1
$region0: #{rotary_encoding.1}
  #allocation0 [shape = 'u32[]', space=smem, size = 0x4, offset = 0x4, fixed_abs, tag = 'smem constant byte address 0x4 - core index']
  #allocation1 [shape = 'u32[144,128]{1,0:T(1,128)}', space=vmem, size = 0x12000, scoped, tag = 'internal scratch']
  %s0 = inlined_call_operand.vmem [shape: f32[1,256], index: 0, kind: input, shape index: {}]
  %s1 = inlined_call_operand.vmem [shape: f32[1,256], index: 1, kind: input, shape index: {}]
  %s2 = inlined_call_operand.vmem [shape: f32[2,256], index: 2, kind: input, shape index: {}, may-alias: {2,4}]
  %s3 = inlined_call_operand.vmem [shape: f32[2,256], index: 3, kind: input, shape index: {}, may-alias: {3,5}]
  %s4 = inlined_call_operand.vmem [shape: f32[2,256], index: 4, kind: output, shape index: {0}, may-alias: {2,4}]
  %s5 = inlined_call_operand.vmem [shape: f32[2,256], index: 5, kind: output, shape index: {1}, may-alias: {3,5}]
  %6 = xla_tuple %s4, %s5
  %s7 = sld [smem:[#allocation0]]
  $region34: #{rotary_encoding.1} parent=0
    _
  %s9 = ssub.s32 1, %s7
  %s10 = scalar_select 0, %s9, %s7
  // Predicated region
  $region2: #{rotary_encoding.1} parent=0 // pred_check
    _
  $region3: #{rotary_encoding.1} parent=0 // pred_check_branch
    %12 = sbr.rel (0) target = $region5
  $region4: #{rotary_encoding.1} parent=0 // pred_region
    _
  $region5: #{rotary_encoding.1} parent=0 // pred_fallthru
    _
  // Predicated region
  $region6: #{rotary_encoding.1} parent=0 // pred_check
    _
  $region7: #{rotary_encoding.1} parent=0 // pred_check_branch
    %14 = sbr.rel (0) target = $region9
  $region8: #{rotary_encoding.1} parent=0 // pred_region
    _
  $region9: #{rotary_encoding.1} parent=0 // pred_fallthru
    _
  // Predicated region
  $region10: #{rotary_encoding.1} parent=0 // pred_check
    _
  $region11: #{rotary_encoding.1} parent=0 // pred_check_branch
    %16 = sbr.rel (0) target = $region13
  $region12: #{rotary_encoding.1} parent=0 // pred_region
    _
  $region13: #{rotary_encoding.1} parent=0 // pred_fallthru
    _
  // Predicated region
  $region14: #{rotary_encoding.1} parent=0 // pred_check
    _
  $region15: #{rotary_encoding.1} parent=0 // pred_check_branch
    %18 = sbr.rel (0) target = $region17
  $region16: #{rotary_encoding.1} parent=0 // pred_region
    _
  $region17: #{rotary_encoding.1} parent=0 // pred_fallthru
    _
  %v19 = vld [vmem:[%s0] sm:$0x3]
  %v20 = vld [vmem:[%s1] sm:$0x3]
  %v21 = vlaneseq
  %v22 = vand.u32 %v21, 127
  %v23 = vadd.s32 %v22, 128
  %vm24 = vcmp.lt.s32.totalorder %v22, 0
  %v25 = vsub.s32 0, %v22
  %v26 = vsel %vm24, %v25, %v22
  %v27 = vshrl.u32 %v26, 1
  %v28 = vand.u32 %v26, 1
  %v29 = vsub.s32 0, %v28
  %v30 = vsel %vm24, %v29, %v28
  %vm31 = vcmp.lt.s32.totalorder %v23, 0
  %v32 = vsub.s32 0, %v23
  %v33 = vsel %vm31, %v32, %v23
  %v34 = vshrl.u32 %v33, 1
  %v35 = vand.u32 %v33, 1
  %v36 = vsub.s32 0, %v35
  %v37 = vsel %vm31, %v36, %v35
  %vm38 = vcmp.ne.s32.totalorder %v30, 0
  %vm39 = vcmp.ne.s32.totalorder %v37, 0
  %vm40 = vcmp.lt.s32.totalorder %v30, 0
  %vm41 = vcmp.lt.s32.totalorder %v37, 0
  %vm42 = vmand %vm40, %vm38
  %vm43 = vmand %vm41, %vm39
  %v44 = vadd.s32 %v30, 2
  %v45 = vadd.s32 %v37, 2
  %v46 = vsel %vm42, %v44, %v30
  %v47 = vsel %vm43, %v45, %v37
  %vm48 = vcmp.eq.s32.totalorder %v46, 0
  %vm49 = vcmp.eq.s32.totalorder %v47, 0
  %v50 = vld [vmem:[%s2] sm:$0xf]
  %v52 = vlaneseq
  %v53 = vshrl.u32 %v52, 7
  %v54 = vsub.s32 0, %v53
  %v55 = vrot.slane %v20, %v54
  %v56 = vlaneseq
  %v57 = vshrl.u32 %v56, 7
  %v58 = vsub.s32 1, %v57
  %v59 = vrot.slane %v20, %v58
  %v60 = vcombine.low %v55, %v59
  %v62 = vunpack.c.l.s4 1983009808
  %v63 = vunpack.c.0.s8 %v62
  %v64 = vlaneseq
  %v65 = vshrl.u32 %v64, 7
  %v66 = vsub.s32 %v63, %v65
  %v67 = vrot.slane %v60, %v66
  %v69 = vmul.f32 %v50, %v67
  %v72 = vunpack.c.l.s4 1983009808
  %v73 = vunpack.c.0.s8 %v72
  %v74 = vlaneseq
  %v75 = vshrl.u32 %v74, 7
  %v76 = vsub.s32 %v73, %v75
  %v77 = vrot.slane %v69, %v76
  %v78 = vcombine.high %v77, %v77
  %81 = vrot.lane.b32.xlu0 %v77, 127
  %v82 = vpop.permute.xlu0 %81
  %83 = vrot.lane.b32.xlu0 %v78, 127
  %v84 = vpop.permute.xlu0 %83
  %vm85 = vcmp.lt.s32.totalorder %v22, 127
  %v86 = vsel %vm85, %v82, %v84
  %v87 = vsel %vm85, %v84, %v82
  %88 = vrot.lane.b32.xlu0 %v77, 1
  %v89 = vpop.permute.xlu0 %88
  %90 = vrot.lane.b32.xlu0 %v78, 1
  %v91 = vpop.permute.xlu0 %90
  %vm92 = vcmp.lt.s32.totalorder %v22, 1
  %v93 = vsel %vm92, %v89, %v91
  %v94 = vsel %vm92, %v91, %v89
  %v96 = vlaneseq
  %v97 = vshrl.u32 %v96, 7
  %v98 = vsub.s32 0, %v97
  %v99 = vrot.slane %v19, %v98
  %v100 = vlaneseq
  %v101 = vshrl.u32 %v100, 7
  %v102 = vsub.s32 1, %v101
  %v103 = vrot.slane %v19, %v102
  %v104 = vcombine.low %v99, %v103
  %v106 = vunpack.c.l.s4 1983009808
  %v107 = vunpack.c.0.s8 %v106
  %v108 = vlaneseq
  %v109 = vshrl.u32 %v108, 7
  %v110 = vsub.s32 %v107, %v109
  %v111 = vrot.slane %v104, %v110
  %v113 = vmul.f32 %v50, %v111
  %v114 = vsel %vm48, %v86, %v94
  %v115 = vsel %vm49, %v87, %v93
  %v118 = vcombine.low %v114, %v115
  %v120 = vunpack.c.l.s4 1983009808
  %v121 = vunpack.c.0.s8 %v120
  %v122 = vlaneseq
  %v123 = vshrl.u32 %v122, 7
  %v124 = vsub.s32 %v121, %v123
  %v125 = vrot.slane %v118, %v124
  %v127 = vadd.f32 %v113, %v125
  %128 = vst [vmem:[%s4] sm:$0xf] %v127
  %v129 = vld [vmem:[%s3] sm:$0xf]
  %v130 = vmul.f32 %v129, %v67
  %v133 = vunpack.c.l.s4 1983009808
  %v134 = vunpack.c.0.s8 %v133
  %v135 = vlaneseq
  %v136 = vshrl.u32 %v135, 7
  %v137 = vsub.s32 %v134, %v136
  %v138 = vrot.slane %v130, %v137
  %v139 = vcombine.high %v138, %v138
  %142 = vrot.lane.b32.xlu0 %v138, 127
  %v143 = vpop.permute.xlu0 %142
  %144 = vrot.lane.b32.xlu0 %v139, 127
  %v145 = vpop.permute.xlu0 %144
  %v146 = vsel %vm85, %v143, %v145
  %v147 = vsel %vm85, %v145, %v143
  %148 = vrot.lane.b32.xlu0 %v138, 1
  %v149 = vpop.permute.xlu0 %148
  %150 = vrot.lane.b32.xlu0 %v139, 1
  %v151 = vpop.permute.xlu0 %150
  %v152 = vsel %vm92, %v149, %v151
  %v153 = vsel %vm92, %v151, %v149
  %v154 = vmul.f32 %v129, %v111
  %v155 = vsel %vm48, %v146, %v153
  %v156 = vsel %vm49, %v147, %v152
  %v159 = vcombine.low %v155, %v156
  %v161 = vunpack.c.l.s4 1983009808
  %v162 = vunpack.c.0.s8 %v161
  %v163 = vlaneseq
  %v164 = vshrl.u32 %v163, 7
  %v165 = vsub.s32 %v162, %v164
  %v166 = vrot.slane %v159, %v165
  %v168 = vadd.f32 %v154, %v166
  %169 = vst [vmem:[%s5] sm:$0xf] %v168
  // Predicated region
  $region18: #{rotary_encoding.1} parent=0 // pred_check
    _
  $region19: #{rotary_encoding.1} parent=0 // pred_check_branch
    %171 = sbr.rel (0) target = $region21
  $region20: #{rotary_encoding.1} parent=0 // pred_region
    _
  $region21: #{rotary_encoding.1} parent=0 // pred_fallthru
    _
  // Predicated region
  $region22: #{rotary_encoding.1} parent=0 // pred_check
    _
  $region23: #{rotary_encoding.1} parent=0 // pred_check_branch
    %173 = sbr.rel (0) target = $region25
  $region24: #{rotary_encoding.1} parent=0 // pred_region
    _
  $region25: #{rotary_encoding.1} parent=0 // pred_fallthru
    _
  // Predicated region
  $region26: #{rotary_encoding.1} parent=0 // pred_check
    _
  $region27: #{rotary_encoding.1} parent=0 // pred_check_branch
    %175 = sbr.rel (0) target = $region29
  $region28: #{rotary_encoding.1} parent=0 // pred_region
    _
  $region29: #{rotary_encoding.1} parent=0 // pred_fallthru
    _
  // Predicated region
  $region30: #{rotary_encoding.1} parent=0 // pred_check
    _
  $region31: #{rotary_encoding.1} parent=0 // pred_check_branch
    %177 = sbr.rel (0) target = $region33
  $region32: #{rotary_encoding.1} parent=0 // pred_region
    _
  $region33: #{rotary_encoding.1} parent=0 // pred_fallthru
    _

</llo_original>
